<compile_context>
chip_gen: v7x
topology: tpu7x:2x2x1
jax: 0.10.0
libtpu: 0.0.40
codegen_flags: <defaults>
</compile_context>

<pallas_src>
import jax
import jax.numpy as jnp
from jax.experimental import pallas as pl
from jax.experimental.pallas import tpu as pltpu

H1, H2 = 32, 16          # hidden sizes fixed by the PyTorch module


def mlp_kernel(x_ref, w1_ref, b1_ref, w2_ref, b2_ref, w3_ref, b3_ref, o_ref):
    # x tile: [TB, input_size] f32 -> cast to bf16 in-kernel (VPU has huge slack).
    x = x_ref[...].astype(jnp.bfloat16)

    # fc1: bf16 MXU matmul, f32 accumulate; bias + ReLU in f32.
    w1 = w1_ref[...].astype(jnp.bfloat16)
    h1 = jnp.dot(x, w1, preferred_element_type=jnp.float32) + b1_ref[...]
    h1 = jnp.maximum(h1, 0.0).astype(jnp.bfloat16)

    # Dropout(0.1): identity in eval mode.
    # TODO(synk): training-mode dropout would use pltpu.prng_seed + prng_random_bits.

    # fc2: same pattern.
    w2 = w2_ref[...].astype(jnp.bfloat16)
    h2 = jnp.dot(h1, w2, preferred_element_type=jnp.float32) + b2_ref[...]
    h2 = jnp.maximum(h2, 0.0).astype(jnp.bfloat16)

    # fc3 -> exact-width f32 logits (masked store is fine; kernel is HBM-bound).
    w3 = w3_ref[...].astype(jnp.bfloat16)
    o_ref[...] = jnp.dot(h2, w3, preferred_element_type=jnp.float32) + b3_ref[...]


def sample_nn_classifier(x, params, *, tb_max=4096):
    """x: [B, input_size] float32; params stored as W:[in,out], b:[1,out]."""
    w1, b1 = params["w1"], params["b1"]
    w2, b2 = params["w2"], params["b2"]
    w3, b3 = params["w3"], params["b3"]

    B, input_size = x.shape
    num_classes = w3.shape[1]

    # ---- batch tiling: TB multiple of 8 (f32 sublane pack).  Cap TB so that
    # the grid has >= 2 steps when B is large enough (v7x: 2 TensorCores).
    tb_half = ((pl.cdiv(B, 2) + 7) // 8) * 8        # round_up(cdiv(B, 2), 8)
    TB = max(8, min(tb_max, tb_half))
    n_tiles = pl.cdiv(B, TB)                        # last block clipped by Pallas

    # Weights/biases: full arrays, constant block index -> resident across batch tiles.
    resident = lambda arr: pl.BlockSpec(arr.shape, lambda i: (0, 0))

    # ---- scheduler hints: honest FLOP / byte counts for the unpadded problem.
    flops = 2 * B * (input_size * H1 + H1 * H2 + H2 * num_classes)
    weight_bytes = 4 * (w1.size + b1.size + w2.size + b2.size + w3.size + b3.size)
    bytes_accessed = (
        B * input_size * 4              # f32 x read
        + weight_bytes                  # f32 params (read once, resident)
        + B * num_classes * 4           # f32 logits write
    )

    # ---- VMEM budget: double-buffered x / out tiles + resident params + temporaries.
    vmem_needed = (
        2 * TB * input_size * 4
        + 2 * TB * num_classes * 4
        + 2 * weight_bytes
        + TB * (input_size + H1 + H2) * 8   # rough in-kernel f32/bf16 temporaries
    )
    vmem_limit = int(min(32 * 1024 * 1024, max(16 * 1024 * 1024, 2 * vmem_needed)))

    out = pl.pallas_call(
        mlp_kernel,
        out_shape=jax.ShapeDtypeStruct((B, num_classes), jnp.float32),
        grid=(n_tiles,),
        in_specs=[
            pl.BlockSpec((TB, input_size), lambda i: (i, 0)),  # streamed batch tiles
            resident(w1), resident(b1),
            resident(w2), resident(b2),
            resident(w3), resident(b3),
        ],
        out_specs=pl.BlockSpec((TB, num_classes), lambda i: (i, 0)),
        compiler_params=pltpu.CompilerParams(
            dimension_semantics=("parallel",),
            vmem_limit_bytes=vmem_limit,
        ),
        cost_estimate=pl.CostEstimate(
            flops=flops, transcendentals=0, bytes_accessed=bytes_accessed),
    )(x.astype(jnp.float32), w1, b1, w2, b2, w3, b3)

    return out


def init_params(key, input_size, num_classes):
    """Deterministic init mirroring nn.Linear shapes (stored as [in, out])."""
    ks = jax.random.split(key, 6)

    def linear(kw, kb, fan_in, fan_out):
        bound = 1.0 / jnp.sqrt(fan_in)
        w = jax.random.uniform(kw, (fan_in, fan_out), jnp.float32, -bound, bound)
        b = jax.random.uniform(kb, (1, fan_out), jnp.float32, -bound, bound)
        return w, b

    w1, b1 = linear(ks[0], ks[1], input_size, H1)
    w2, b2 = linear(ks[2], ks[3], H1, H2)
    w3, b3 = linear(ks[4], ks[5], H2, num_classes)
    return {"w1": w1, "b1": b1, "w2": w2, "b2": b2, "w3": w3, "b3": b3}


if __name__ == "__main__":
    key = jax.random.PRNGKey(0)
    input_size = 64
    num_classes = 10
    batch = 8

    k_params, k_x = jax.random.split(key)
    params = init_params(k_params, input_size, num_classes)
    x = jax.random.normal(k_x, (batch, input_size), jnp.float32)

    out = sample_nn_classifier(x, params)
    out = jax.block_until_ready(out)
    assert out.shape == (batch, num_classes)

    # bf16-matched reference (same dtype path as the kernel, eval-mode dropout).
    xb = x.astype(jnp.bfloat16)
    ref = jnp.dot(xb, params["w1"].astype(jnp.bfloat16),
                  preferred_element_type=jnp.float32) + params["b1"]
    ref = jnp.maximum(ref, 0.0).astype(jnp.bfloat16)
    ref = jnp.dot(ref, params["w2"].astype(jnp.bfloat16),
                  preferred_element_type=jnp.float32) + params["b2"]
    ref = jnp.maximum(ref, 0.0).astype(jnp.bfloat16)
    ref = jnp.dot(ref, params["w3"].astype(jnp.bfloat16),
                  preferred_element_type=jnp.float32) + params["b3"]
    assert jnp.allclose(out, ref, atol=2e-2, rtol=2e-2)

    # Sanity vs full-f32 math (bf16 matmul path -> looser tolerance).
    ref32 = jnp.maximum(x @ params["w1"] + params["b1"], 0.0)
    ref32 = jnp.maximum(ref32 @ params["w2"] + params["b2"], 0.0)
    ref32 = ref32 @ params["w3"] + params["b3"]
    assert jnp.allclose(out, ref32, atol=5e-2, rtol=5e-2)

    print("KERNEL_OK")
</pallas_src>

<mosaic_0001>
module attributes {stable_mosaic.version = 11 : i64} {
  func.func @mlp_kernel(%arg0: i32, %arg1: memref<8x64xf32, #tpu.memory_space<vmem>>, %arg2: memref<64x32xf32, #tpu.memory_space<vmem>>, %arg3: memref<1x32xf32, #tpu.memory_space<vmem>>, %arg4: memref<32x16xf32, #tpu.memory_space<vmem>>, %arg5: memref<1x16xf32, #tpu.memory_space<vmem>>, %arg6: memref<16x10xf32, #tpu.memory_space<vmem>>, %arg7: memref<1x10xf32, #tpu.memory_space<vmem>>, %arg8: memref<8x10xf32, #tpu.memory_space<vmem>>) attributes {dimension_semantics = [#tpu.dimension_semantics<parallel>], iteration_bounds = array<i64: 1>, scalar_prefetch = 0 : i64, scratch_operands = 0 : i64, tpu.core_type = #tpu.core_type<tc>, window_params = [{transform_indices = @transform_0, window_bounds = array<i64: 8, 64>}, {pipeline_mode = #tpu.pipeline_mode<synchronous>, transform_indices = @transform_1, window_bounds = array<i64: 64, 32>}, {pipeline_mode = #tpu.pipeline_mode<synchronous>, transform_indices = @transform_2, window_bounds = array<i64: 1, 32>}, {pipeline_mode = #tpu.pipeline_mode<synchronous>, transform_indices = @transform_3, window_bounds = array<i64: 32, 16>}, {pipeline_mode = #tpu.pipeline_mode<synchronous>, transform_indices = @transform_4, window_bounds = array<i64: 1, 16>}, {pipeline_mode = #tpu.pipeline_mode<synchronous>, transform_indices = @transform_5, window_bounds = array<i64: 16, 10>}, {pipeline_mode = #tpu.pipeline_mode<synchronous>, transform_indices = @transform_6, window_bounds = array<i64: 1, 10>}, {transform_indices = @transform_7, window_bounds = array<i64: 8, 10>}]} {
    %c0 = arith.constant 0 : index
    %c0_0 = arith.constant 0 : index
    %0 = vector.load %arg1[%c0, %c0_0] : memref<8x64xf32, #tpu.memory_space<vmem>>, vector<8x64xf32>
    %1 = arith.truncf %0 : vector<8x64xf32> to vector<8x64xbf16>
    %c0_1 = arith.constant 0 : index
    %c0_2 = arith.constant 0 : index
    %2 = vector.load %arg2[%c0_1, %c0_2] : memref<64x32xf32, #tpu.memory_space<vmem>>, vector<64x32xf32>
    %3 = arith.truncf %2 : vector<64x32xf32> to vector<64x32xbf16>
    %cst = arith.constant dense<0.000000e+00> : vector<8x32xf32>
    %4 = tpu.matmul %1, %3, %cst {dimension_numbers = #tpu.dot_dimension_numbers<[1], [0], [0], [1], [0, 0, 1, 1], [], []>} : vector<8x64xbf16>, vector<64x32xbf16>, vector<8x32xf32> -> vector<8x32xf32>
    %c0_3 = arith.constant 0 : index
    %c0_4 = arith.constant 0 : index
    %5 = vector.load %arg3[%c0_3, %c0_4] : memref<1x32xf32, #tpu.memory_space<vmem>>, vector<1x32xf32>
    %6 = vector.broadcast %5 : vector<1x32xf32> to vector<8x32xf32>
    %7 = arith.addf %4, %6 : vector<8x32xf32>
    %cst_5 = arith.constant 0.000000e+00 : f32
    %8 = vector.broadcast %cst_5 : f32 to vector<8x32xf32>
    %9 = arith.maximumf %7, %8 : vector<8x32xf32>
    %10 = arith.truncf %9 : vector<8x32xf32> to vector<8x32xbf16>
    %c0_6 = arith.constant 0 : index
    %c0_7 = arith.constant 0 : index
    %11 = vector.load %arg4[%c0_6, %c0_7] : memref<32x16xf32, #tpu.memory_space<vmem>>, vector<32x16xf32>
    %12 = arith.truncf %11 : vector<32x16xf32> to vector<32x16xbf16>
    %cst_8 = arith.constant dense<0.000000e+00> : vector<8x16xf32>
    %13 = tpu.matmul %10, %12, %cst_8 {dimension_numbers = #tpu.dot_dimension_numbers<[1], [0], [0], [1], [0, 0, 1, 1], [], []>} : vector<8x32xbf16>, vector<32x16xbf16>, vector<8x16xf32> -> vector<8x16xf32>
    %c0_9 = arith.constant 0 : index
    %c0_10 = arith.constant 0 : index
    %14 = vector.load %arg5[%c0_9, %c0_10] : memref<1x16xf32, #tpu.memory_space<vmem>>, vector<1x16xf32>
    %15 = vector.broadcast %14 : vector<1x16xf32> to vector<8x16xf32>
    %16 = arith.addf %13, %15 : vector<8x16xf32>
    %cst_11 = arith.constant 0.000000e+00 : f32
    %17 = vector.broadcast %cst_11 : f32 to vector<8x16xf32>
    %18 = arith.maximumf %16, %17 : vector<8x16xf32>
    %19 = arith.truncf %18 : vector<8x16xf32> to vector<8x16xbf16>
    %c0_12 = arith.constant 0 : index
    %c0_13 = arith.constant 0 : index
    %20 = vector.load %arg6[%c0_12, %c0_13] : memref<16x10xf32, #tpu.memory_space<vmem>>, vector<16x10xf32>
    %21 = arith.truncf %20 : vector<16x10xf32> to vector<16x10xbf16>
    %cst_14 = arith.constant dense<0.000000e+00> : vector<8x10xf32>
    %22 = tpu.matmul %19, %21, %cst_14 {dimension_numbers = #tpu.dot_dimension_numbers<[1], [0], [0], [1], [0, 0, 1, 1], [], []>} : vector<8x16xbf16>, vector<16x10xbf16>, vector<8x10xf32> -> vector<8x10xf32>
    %c0_15 = arith.constant 0 : index
    %c0_16 = arith.constant 0 : index
    %23 = vector.load %arg7[%c0_15, %c0_16] : memref<1x10xf32, #tpu.memory_space<vmem>>, vector<1x10xf32>
    %24 = vector.broadcast %23 : vector<1x10xf32> to vector<8x10xf32>
    %25 = arith.addf %22, %24 : vector<8x10xf32>
    %c0_17 = arith.constant 0 : index
    %c0_18 = arith.constant 0 : index
    %26 = vector.load %arg8[%c0_17, %c0_18] : memref<8x10xf32, #tpu.memory_space<vmem>>, vector<8x10xf32>
    tpu.vector_store %arg8[%c0_17, %c0_18], %25 {strides = array<i32>} : memref<8x10xf32, #tpu.memory_space<vmem>>, vector<8x10xf32>,
    return
  }
  func.func @transform_0(%arg0: i32) -> (i32, i32) {
    %c0_i32 = arith.constant 0 : i32
    %c0_i32_0 = arith.constant 0 : i32
    return %arg0, %c0_i32 : i32, i32
  }
  func.func @transform_1(%arg0: i32) -> (i32, i32) {
    %c0_i32 = arith.constant 0 : i32
    %c0_i32_0 = arith.constant 0 : i32
    %c0_i32_1 = arith.constant 0 : i32
    return %c0_i32, %c0_i32_0 : i32, i32
  }
  func.func @transform_2(%arg0: i32) -> (i32, i32) {
    %c0_i32 = arith.constant 0 : i32
    %c0_i32_0 = arith.constant 0 : i32
    %c0_i32_1 = arith.constant 0 : i32
    return %c0_i32, %c0_i32_0 : i32, i32
  }
  func.func @transform_3(%arg0: i32) -> (i32, i32) {
    %c0_i32 = arith.constant 0 : i32
    %c0_i32_0 = arith.constant 0 : i32
    %c0_i32_1 = arith.constant 0 : i32
    return %c0_i32, %c0_i32_0 : i32, i32
  }
  func.func @transform_4(%arg0: i32) -> (i32, i32) {
    %c0_i32 = arith.constant 0 : i32
    %c0_i32_0 = arith.constant 0 : i32
    %c0_i32_1 = arith.constant 0 : i32
    return %c0_i32, %c0_i32_0 : i32, i32
  }
  func.func @transform_5(%arg0: i32) -> (i32, i32) {
    %c0_i32 = arith.constant 0 : i32
    %c0_i32_0 = arith.constant 0 : i32
    %c0_i32_1 = arith.constant 0 : i32
    return %c0_i32, %c0_i32_0 : i32, i32
  }
  func.func @transform_6(%arg0: i32) -> (i32, i32) {
    %c0_i32 = arith.constant 0 : i32
    %c0_i32_0 = arith.constant 0 : i32
    %c0_i32_1 = arith.constant 0 : i32
    return %c0_i32, %c0_i32_0 : i32, i32
  }
  func.func @transform_7(%arg0: i32) -> (i32, i32) {
    %c0_i32 = arith.constant 0 : i32
    %c0_i32_0 = arith.constant 0 : i32
    return %arg0, %c0_i32 : i32, i32
  }
}

</mosaic_0001>

<llo_original>
// kernel: tpu_custom_call.1
$region0: #{tpu_custom_call.1}
  #allocation0 [shape = 'u32[]', space=smem, size = 0x4, offset = 0x4, fixed_abs, tag = 'smem constant byte address 0x4 - core index']
  #allocation1 [shape = 'u32[144,128]{1,0:T(1,128)}', space=vmem, size = 0x12000, scoped, tag = 'internal scratch']
  %s0 = inlined_call_operand.vmem [shape: f32[8,64], index: 0, kind: input, shape index: {}]
  %s1 = inlined_call_operand.vmem [shape: f32[64,32], index: 1, kind: input, shape index: {}]
  %s2 = inlined_call_operand.vmem [shape: f32[1,32], index: 2, kind: input, shape index: {}]
  %s3 = inlined_call_operand.vmem [shape: f32[32,16], index: 3, kind: input, shape index: {}]
  %s4 = inlined_call_operand.vmem [shape: f32[1,16], index: 4, kind: input, shape index: {}]
  %s5 = inlined_call_operand.vmem [shape: f32[16,10], index: 5, kind: input, shape index: {}]
  %s6 = inlined_call_operand.vmem [shape: f32[1,10], index: 6, kind: input, shape index: {}]
  %s7 = inlined_call_operand.hbm [shape: f32[8,10], index: 7, kind: output, shape index: {}]
  %s8 = sld [smem:[#allocation0]]
  $region38: #{tpu_custom_call.1} parent=0
    _
  %s10 = ssub.s32 1, %s8
  %s11 = scalar_select 0, %s10, %s8
  $region1: #{tpu_custom_call.1} parent=0
    #allocation2 [shape = 'u8[4096]{0}', space=vmem, size = 0x1000, scoped, tag = 'output window, operand 0, single buffered']
    #allocation3 [shape = 's32[1]{0}', space=sflag, size = 0x4, scoped, tag = 'scoped memory for tpu_custom_call.1']
    %12 = vsyncpa [#allocation3], 0
    // Predicated region
    $region2: #{tpu_custom_call.1} parent=1 // pred_check
      _
    $region3: #{tpu_custom_call.1} parent=1 // pred_check_branch
      %14 = sbr.rel (0) target = $region5
    $region4: #{tpu_custom_call.1} parent=1 // pred_region
      _
    $region5: #{tpu_custom_call.1} parent=1 // pred_fallthru
      _
    // Predicated region
    $region6: #{tpu_custom_call.1} parent=1 // pred_check
      _
    $region7: #{tpu_custom_call.1} parent=1 // pred_check_branch
      %16 = sbr.rel (0) target = $region9
    $region8: #{tpu_custom_call.1} parent=1 // pred_region
      _
    $region9: #{tpu_custom_call.1} parent=1 // pred_fallthru
      _
    // Predicated region
    $region10: #{tpu_custom_call.1} parent=1 // pred_check
      _
    $region11: #{tpu_custom_call.1} parent=1 // pred_check_branch
      %18 = sbr.rel (0) target = $region13
    $region12: #{tpu_custom_call.1} parent=1 // pred_region
      _
    $region13: #{tpu_custom_call.1} parent=1 // pred_fallthru
      _
    // Predicated region
    $region14: #{tpu_custom_call.1} parent=1 // pred_check
      _
    $region15: #{tpu_custom_call.1} parent=1 // pred_check_branch
      %20 = sbr.rel (0) target = $region17
    $region16: #{tpu_custom_call.1} parent=1 // pred_region
      _
    $region17: #{tpu_custom_call.1} parent=1 // pred_fallthru
      _
    // Predicated region
    $region18: #{tpu_custom_call.1} parent=1 // pred_check
      _
    $region19: #{tpu_custom_call.1} parent=1 // pred_check_branch
      %22 = sbr.rel (0) target = $region21
    $region20: #{tpu_custom_call.1} parent=1 // pred_region
      _
    $region21: #{tpu_custom_call.1} parent=1 // pred_fallthru
      _
    // Predicated region
    $region22: #{tpu_custom_call.1} parent=1 // pred_check
      _
    $region23: #{tpu_custom_call.1} parent=1 // pred_check_branch
      %24 = sbr.rel (0) target = $region25
    $region24: #{tpu_custom_call.1} parent=1 // pred_region
      _
    $region25: #{tpu_custom_call.1} parent=1 // pred_fallthru
      _
    // Predicated region
    $region26: #{tpu_custom_call.1} parent=1 // pred_check
      _
    $region27: #{tpu_custom_call.1} parent=1 // pred_check_branch
      %26 = sbr.rel (0) target = $region29
    $region28: #{tpu_custom_call.1} parent=1 // pred_region
      _
    $region29: #{tpu_custom_call.1} parent=1 // pred_fallthru
      _
    %v28 = vld [vmem:[%s0] sm:$0xff]
    %v29 = vpack.c.bf16 %v28, %v28
    %v30 = vld [vmem:[%s1] sm:$0xff]
    %v31 = vld [vmem:[%s1 + $0x8] sm:$0xff]
    %v32 = vld [vmem:[%s1 + $0x10] sm:$0xff]
    %v33 = vld [vmem:[%s1 + $0x18] sm:$0xff]
    %v34 = vld [vmem:[%s1 + $0x20] sm:$0xff]
    %v35 = vld [vmem:[%s1 + $0x28] sm:$0xff]
    %v36 = vld [vmem:[%s1 + $0x30] sm:$0xff]
    %v37 = vld [vmem:[%s1 + $0x38] sm:$0xff]
    %v38 = vpack.c.bf16 %v31, %v30
    %v39 = vpack.c.bf16 %v33, %v32
    %v40 = vpack.c.bf16 %v35, %v34
    %v41 = vpack.c.bf16 %v37, %v36
    %v42 = vld [vmem:[%s2] sm:$0x1]
    %v44 = vlaneseq
    %v45 = vshrl.u32 %v44, 7
    %v46 = vsub.s32 0, %v45
    %v47 = vrot.slane %v42, %v46
    %vm49 = vcmask 523264
    %v51 = vsel %vm49, %v29, 0
    %53 = vmatprep.subr.bf16.mxu0 0
    %54 = vmatpush1.bf16.msra.mxu0 %v38
    %55 = vmatprep.subr.bf16.mxu0 0
    %56 = vmatpush1.bf16.msra.mxu0 %v39
    %57 = vmatprep.subr.bf16.mxu0 0
    %58 = vmatpush1.bf16.msra.mxu0 %v40
    %59 = vmatprep.subr.bf16.mxu0 0
    %60 = vmatpush1.bf16.msra.mxu0 %v41
    %61 = vmatprep.subr.bf16.mxu0 0
    %62 = vmatpush1.bf16.msra.mxu0 0
    %63 = vmatprep.subr.bf16.mxu0 0
    %64 = vmatpush1.bf16.msra.mxu0 0
    %65 = vmatprep.subr.bf16.mxu0 0
    %66 = vmatpush1.bf16.msra.mxu0 0
    %67 = vmatprep.subr.bf16.mxu0 0
    %68 = vmatpush1.bf16.msra.mxu0 0
    %69 = vmatprep.subr.bf16.mxu0 0
    %70 = vmatpush1.bf16.msra.mxu0 0
    %71 = vmatprep.subr.bf16.mxu0 0
    %72 = vmatpush1.bf16.msra.mxu0 0
    %73 = vmatprep.subr.bf16.mxu0 0
    %74 = vmatpush1.bf16.msra.mxu0 0
    %75 = vmatprep.subr.bf16.mxu0 0
    %76 = vmatpush1.bf16.msra.mxu0 0
    %77 = vmatprep.subr.bf16.mxu0 0
    %78 = vmatpush1.bf16.msra.mxu0 0
    %79 = vmatprep.subr.bf16.mxu0 0
    %80 = vmatpush1.bf16.msra.mxu0 0
    %81 = vmatprep.subr.bf16.mxu0 0
    %82 = vmatpush1.bf16.msra.mxu0 0
    %83 = vmatprep.subr.bf16.mxu0 0
    %84 = vmatpush1.bf16.msra.mxu0 0
    %85 = vmatprep.mubr.bf16.mxu0 0
    %86 = vmatmul.mubr.bf16.gmra.mrb[0].mxu0 %v51
    %v87 = vpop.f32.mrb[0].mxu0
    %v88 = vadd.f32 %v47, %v87
    %v89 = vpop.f32.mrb[0].mxu0
    %v90 = vpop.f32.mrb[0].mxu0
    %v91 = vpop.f32.mrb[0].mxu0
    %92 = vdwg.mxu0
    %v93 = vmax.f32 %v88, 0.0
    %v94 = vpack.c.bf16 %v93, %v93
    %v95 = vld [vmem:[%s3] sm:$0xff]
    %v96 = vld [vmem:[%s3 + $0x8] sm:$0xff]
    %v97 = vld [vmem:[%s3 + $0x10] sm:$0xff]
    %v98 = vld [vmem:[%s3 + $0x18] sm:$0xff]
    %v99 = vpack.c.bf16 %v96, %v95
    %v100 = vpack.c.bf16 %v98, %v97
    %v101 = vld [vmem:[%s4] sm:$0x1]
    %v103 = vlaneseq
    %v104 = vshrl.u32 %v103, 7
    %v105 = vsub.s32 0, %v104
    %v106 = vrot.slane %v101, %v105
    %vm108 = vcmask 261120
    %v110 = vsel %vm108, %v94, 0
    %112 = vmatprep.subr.bf16.mxu0 0
    %113 = vmatpush1.bf16.msra.mxu0 %v99
    %114 = vmatprep.subr.bf16.mxu0 0
    %115 = vmatpush1.bf16.msra.mxu0 %v100
    %116 = vmatprep.subr.bf16.mxu0 0
    %117 = vmatpush1.bf16.msra.mxu0 0
    %118 = vmatprep.subr.bf16.mxu0 0
    %119 = vmatpush1.bf16.msra.mxu0 0
    %120 = vmatprep.subr.bf16.mxu0 0
    %121 = vmatpush1.bf16.msra.mxu0 0
    %122 = vmatprep.subr.bf16.mxu0 0
    %123 = vmatpush1.bf16.msra.mxu0 0
    %124 = vmatprep.subr.bf16.mxu0 0
    %125 = vmatpush1.bf16.msra.mxu0 0
    %126 = vmatprep.subr.bf16.mxu0 0
    %127 = vmatpush1.bf16.msra.mxu0 0
    %128 = vmatprep.subr.bf16.mxu0 0
    %129 = vmatpush1.bf16.msra.mxu0 0
    %130 = vmatprep.subr.bf16.mxu0 0
    %131 = vmatpush1.bf16.msra.mxu0 0
    %132 = vmatprep.subr.bf16.mxu0 0
    %133 = vmatpush1.bf16.msra.mxu0 0
    %134 = vmatprep.subr.bf16.mxu0 0
    %135 = vmatpush1.bf16.msra.mxu0 0
    %136 = vmatprep.subr.bf16.mxu0 0
    %137 = vmatpush1.bf16.msra.mxu0 0
    %138 = vmatprep.subr.bf16.mxu0 0
    %139 = vmatpush1.bf16.msra.mxu0 0
    %140 = vmatprep.subr.bf16.mxu0 0
    %141 = vmatpush1.bf16.msra.mxu0 0
    %142 = vmatprep.subr.bf16.mxu0 0
    %143 = vmatpush1.bf16.msra.mxu0 0
    %144 = vmatprep.mubr.bf16.mxu0 0
    %145 = vmatmul.mubr.bf16.gmra.mrb[0].mxu0 %v110
    %v146 = vpop.f32.mrb[0].mxu0
    %v147 = vadd.f32 %v106, %v146
    %v148 = vpop.f32.mrb[0].mxu0
    %v149 = vpop.f32.mrb[0].mxu0
    %v150 = vpop.f32.mrb[0].mxu0
    %151 = vdwg.mxu0
    %v152 = vmax.f32 %v147, 0.0
    %v153 = vpack.c.bf16 %v152, %v152
    %v154 = vld [vmem:[%s5] sm:$0xff]
    %v155 = vld [vmem:[%s5 + $0x8] sm:$0xff]
    %v156 = vpack.c.bf16 %v155, %v154
    %v157 = vld [vmem:[%s6] sm:$0x1]
    %v159 = vlaneseq
    %v160 = vshrl.u32 %v159, 7
    %v161 = vsub.s32 0, %v160
    %v162 = vrot.slane %v157, %v161
    %vm164 = vcmask 130048
    %v166 = vsel %vm164, %v153, 0
    %168 = vmatprep.subr.bf16.mxu0 0
    %169 = vmatpush1.bf16.msra.mxu0 %v156
    %170 = vmatprep.subr.bf16.mxu0 0
    %171 = vmatpush1.bf16.msra.mxu0 0
    %172 = vmatprep.subr.bf16.mxu0 0
    %173 = vmatpush1.bf16.msra.mxu0 0
    %174 = vmatprep.subr.bf16.mxu0 0
    %175 = vmatpush1.bf16.msra.mxu0 0
    %176 = vmatprep.subr.bf16.mxu0 0
    %177 = vmatpush1.bf16.msra.mxu0 0
    %178 = vmatprep.subr.bf16.mxu0 0
    %179 = vmatpush1.bf16.msra.mxu0 0
    %180 = vmatprep.subr.bf16.mxu0 0
    %181 = vmatpush1.bf16.msra.mxu0 0
    %182 = vmatprep.subr.bf16.mxu0 0
    %183 = vmatpush1.bf16.msra.mxu0 0
    %184 = vmatprep.subr.bf16.mxu0 0
    %185 = vmatpush1.bf16.msra.mxu0 0
    %186 = vmatprep.subr.bf16.mxu0 0
    %187 = vmatpush1.bf16.msra.mxu0 0
    %188 = vmatprep.subr.bf16.mxu0 0
    %189 = vmatpush1.bf16.msra.mxu0 0
    %190 = vmatprep.subr.bf16.mxu0 0
    %191 = vmatpush1.bf16.msra.mxu0 0
    %192 = vmatprep.subr.bf16.mxu0 0
    %193 = vmatpush1.bf16.msra.mxu0 0
    %194 = vmatprep.subr.bf16.mxu0 0
    %195 = vmatpush1.bf16.msra.mxu0 0
    %196 = vmatprep.subr.bf16.mxu0 0
    %197 = vmatpush1.bf16.msra.mxu0 0
    %198 = vmatprep.subr.bf16.mxu0 0
    %199 = vmatpush1.bf16.msra.mxu0 0
    %200 = vmatprep.mubr.bf16.mxu0 0
    %201 = vmatmul.mubr.bf16.gmra.mrb[0].mxu0 %v166
    %v202 = vpop.f32.mrb[0].mxu0
    %v203 = vadd.f32 %v162, %v202
    %v204 = vpop.f32.mrb[0].mxu0
    %v205 = vpop.f32.mrb[0].mxu0
    %v206 = vpop.f32.mrb[0].mxu0
    %207 = vdwg.mxu0
    %vm208 = vcmask 80896
    %209 = vst.msk [vmem:[#allocation2] sm:$0xff] %vm208, %v203
    // Predicated region
    $region30: #{tpu_custom_call.1} parent=1 // pred_check
      _
    $region31: #{tpu_custom_call.1} parent=1 // pred_check_branch
      %211 = sbr.rel (0) target = $region33
    $region32: #{tpu_custom_call.1} parent=1 // pred_region
      %s213 = ssub.s32 128, 128
      %214 = vsyncadd [#allocation3], %s213
      %s216 = sshll.u32 [#allocation2], 4
      %s217 = int_to_ptr.vmem [resolvable:$true] %s216
      %219 = dma.vmem_to_hbm [thread:$0]  %s217, 128, %s7, [#allocation3]
    $region33: #{tpu_custom_call.1} parent=1 // pred_fallthru
      _
    // Predicated region
    $region34: #{tpu_custom_call.1} parent=1 // pred_check
      _
    $region35: #{tpu_custom_call.1} parent=1 // pred_check_branch
      %221 = sbr.rel (0) target = $region37
    $region36: #{tpu_custom_call.1} parent=1 // pred_region
      %222 = dma.done [#allocation3], 128
    $region37: #{tpu_custom_call.1} parent=1 // pred_fallthru
      _
    %223 = vsyncpa [#allocation3], 1

</llo_original>
